<compile_context>
chip_gen: v7x
topology: tpu7x:2x2x1
jax: 0.10.0
libtpu: 0.0.40
codegen_flags: <defaults>
</compile_context>

<pallas_src>
import jax
import jax.numpy as jnp
from jax.experimental import pallas as pl
from jax.experimental.pallas import tpu as pltpu

LN_EPS = 1e-5


def _round_up(x, m):
    return ((x + m - 1) // m) * m


def _cdiv(a, b):
    return (a + b - 1) // b


# -----------------------------------------------------------------------------
# Kernel
# -----------------------------------------------------------------------------
def critic_kernel(jobs_ref, clu_ref, gpu_ref,
                  wj_ref, wc_ref, wg_ref,
                  pool_ref, bcast_ref, vecs_ref, w1_ref, head_ref,
                  out_ref):
    """One batch tile of the full Critic forward.

    jobs_ref : (bt, 5*max_jobs)
    clu_ref  : (bt, num_nodes)
    gpu_ref  : (bt, num_nodes*num_gpus)
    wj_ref   : (5*max_jobs, enc_out)   job encoder, zero-padded to full width
    wc_ref   : (num_nodes, enc_out)    cluster encoder, zero-padded
    wg_ref   : (num_nodes*num_gpus, enc_out) gpu encoder, zero-padded
    pool_ref : (enc_out, G)            group-mean pooling (G = max_jobs + 1)
    bcast_ref: (G, enc_out)            group -> column broadcast-back
    vecs_ref : (4, enc_out)            rows = [bias, gamma, beta, pass_mask]
    w1_ref   : (enc_out, hidden)       value_net first Linear
    head_ref : (3, hidden)             rows = [b1, w2_row, (b2 at [2,0])]
    out_ref  : (bt, 1)
    """
    b_enc = vecs_ref[0:1, :]
    gamma_p = vecs_ref[1:2, :]
    beta_p = vecs_ref[2:3, :]
    pass_p = vecs_ref[3:4, :]

    # ---- all three encoders as three dots summed into one (bt, enc_out) ----
    z = (jnp.dot(jobs_ref[...], wj_ref[...], preferred_element_type=jnp.float32)
         + jnp.dot(clu_ref[...], wc_ref[...], preferred_element_type=jnp.float32)
         + jnp.dot(gpu_ref[...], wg_ref[...], preferred_element_type=jnp.float32)
         + b_enc)

    # ---- grouped LayerNorm (16-wide groups) via pooled matmuls -------------
    # mean and E[z^2] pooled back-to-back (independent MXU pushes), then
    # broadcast back to columns.  gpu columns get mu = var = 0 (no LN group),
    # they are passed through via pass_p below, gamma_p is 0 there.
    pool = pool_ref[...]
    bcast = bcast_ref[...]
    z_g = jnp.dot(z, pool, preferred_element_type=jnp.float32)        # (bt, G)
    zz_g = jnp.dot(z * z, pool, preferred_element_type=jnp.float32)   # (bt, G)
    var_g = zz_g - z_g * z_g
    mu = jnp.dot(z_g, bcast, preferred_element_type=jnp.float32)      # (bt, enc_out)
    var = jnp.dot(var_g, bcast, preferred_element_type=jnp.float32)
    normed = (z - mu) * jax.lax.rsqrt(var + LN_EPS)
    feat = jnp.maximum(normed * gamma_p + z * pass_p + beta_p, 0.0)   # (bt, enc_out)

    # ---- value head: Linear(enc_out, hidden) -> ReLU -> Linear(hidden, 1) --
    h = jnp.maximum(
        jnp.dot(feat, w1_ref[...], preferred_element_type=jnp.float32)
        + head_ref[0:1, :],
        0.0,
    )
    # N=1 matmul replaced by VPU multiply + lane reduction.
    out_ref[...] = (jnp.sum(h * head_ref[1:2, :], axis=-1, keepdims=True)
                    + head_ref[2:3, 0:1])


# -----------------------------------------------------------------------------
# Parameter handling
# -----------------------------------------------------------------------------
def init_params(key, num_nodes, num_gpus, max_jobs, hidden_dim):
    """Deterministic init, PyTorch-Linear-like uniform(-1/sqrt(fan_in), +)."""
    def lin(k, fan_in, fan_out):
        k1, k2 = jax.random.split(k)
        bound = 1.0 / jnp.sqrt(fan_in)
        w = jax.random.uniform(k1, (fan_in, fan_out), jnp.float32, -bound, bound)
        b = jax.random.uniform(k2, (1, fan_out), jnp.float32, -bound, bound)
        return w, b

    ng = num_nodes * num_gpus
    in_dim = 16 * max_jobs + 16 + 16
    keys = jax.random.split(key, 5)
    wj, bj = lin(keys[0], 5, 16)
    wc, bc = lin(keys[1], num_nodes, 16)
    wg, bg = lin(keys[2], ng, 16)
    w1, b1 = lin(keys[3], in_dim, hidden_dim)
    w2, b2 = lin(keys[4], hidden_dim, 1)
    gj = jnp.ones((1, 16), jnp.float32)
    betaj = jnp.zeros((1, 16), jnp.float32)
    gc = jnp.ones((1, 16), jnp.float32)
    betac = jnp.zeros((1, 16), jnp.float32)
    return dict(wj=wj, bj=bj, gj=gj, betaj=betaj,
                wc=wc, bc=bc, gc=gc, betac=betac,
                wg=wg, bg=bg, w1=w1, b1=b1, w2=w2, b2=b2)


def pack_params(params, num_nodes, num_gpus, max_jobs, hidden_dim):
    """Pack the 17 small PyTorch-style tensors into dense kernel inputs."""
    mj = max_jobs
    nn_ = num_nodes
    ng = num_nodes * num_gpus
    enc_out = 16 * mj + 32
    G = mj + 1   # LayerNorm groups: mj job slots + 1 cluster group

    # Encoder weights, each zero-padded to full enc_out width so the kernel
    # sums three dots instead of concatenating.
    wj_full = jnp.zeros((5 * mj, enc_out), jnp.float32)
    for j in range(mj):
        wj_full = wj_full.at[5 * j:5 * j + 5, 16 * j:16 * j + 16].set(params["wj"])
    wc_full = jnp.zeros((nn_, enc_out), jnp.float32)
    wc_full = wc_full.at[:, 16 * mj:16 * mj + 16].set(params["wc"])
    wg_full = jnp.zeros((ng, enc_out), jnp.float32)
    wg_full = wg_full.at[:, 16 * mj + 16:].set(params["wg"])

    # Packed per-column vectors: bias / gamma / beta / pass-through mask.
    b_enc = jnp.concatenate(
        [jnp.tile(params["bj"], (1, mj)), params["bc"], params["bg"]], axis=1)
    gamma_p = jnp.concatenate(
        [jnp.tile(params["gj"], (1, mj)), params["gc"],
         jnp.zeros((1, 16), jnp.float32)], axis=1)
    beta_p = jnp.concatenate(
        [jnp.tile(params["betaj"], (1, mj)), params["betac"],
         jnp.zeros((1, 16), jnp.float32)], axis=1)
    pass_p = jnp.concatenate(
        [jnp.zeros((1, 16 * mj + 16), jnp.float32),
         jnp.ones((1, 16), jnp.float32)], axis=1)
    vecs = jnp.concatenate([b_enc, gamma_p, beta_p, pass_p], axis=0)  # (4, enc_out)

    # Pooling / broadcast-back matrices for the grouped LayerNorm.  The gpu
    # block (last 16 columns) belongs to no group: pool rows / bcast columns
    # there are zero, so mu = var = 0 and the pass mask handles it exactly.
    pool = jnp.zeros((enc_out, G), jnp.float32)
    bcast = jnp.zeros((G, enc_out), jnp.float32)
    for g in range(G):
        pool = pool.at[16 * g:16 * g + 16, g].set(1.0 / 16.0)
        bcast = bcast.at[g, 16 * g:16 * g + 16].set(1.0)

    # Value head vectors: row0 = b1, row1 = w2 (as a row), row2[0] = b2.
    head = jnp.zeros((3, hidden_dim), jnp.float32)
    head = head.at[0].set(params["b1"][0])
    head = head.at[1].set(params["w2"][:, 0])
    head = head.at[2, 0].set(params["b2"][0, 0])

    return dict(wj_full=wj_full, wc_full=wc_full, wg_full=wg_full,
                pool=pool, bcast=bcast, vecs=vecs, w1=params["w1"], head=head)


# -----------------------------------------------------------------------------
# Wrapper
# -----------------------------------------------------------------------------
def _param_spec(shape):
    """Grid-invariant parameter BlockSpec; single-buffered when supported."""
    index_map = lambda i, _shape=shape: (0,) * len(_shape)
    try:
        return pl.BlockSpec(shape, index_map, pipeline_mode=pl.Buffered(1))
    except (TypeError, AttributeError, ValueError):
        return pl.BlockSpec(shape, index_map)


def _vmem_limit_bytes(bt, in_dims, enc_out, hidden, G):
    f32 = 4
    dyn = bt * (2 * sum(in_dims)        # batch-tiled inputs (double-buffered)
                + 6 * enc_out           # z / mu / var / normed / feat / slack
                + 2 * hidden            # h + slack
                + 2 * G + 2)            # pooled stats + output (double-buffered)
    static = (sum(in_dims) * enc_out + 2 * G * enc_out + 4 * enc_out
              + enc_out * hidden + 3 * hidden)
    est = 2 * (dyn + static) * f32
    # >= 32 MiB (covers v5e's 16 MiB scoped default), <= 48 MiB (safe under
    # v7x's 64 MiB physical VMEM).
    return int(min(max(est, 32 * 1024 * 1024), 48 * 1024 * 1024))


def critic_forward(state, packed, *, batch_tile=2048):
    jobs = state["jobs"].astype(jnp.float32)
    cluster = state["cluster"].astype(jnp.float32)
    gpu_left = state["gpu_left"].astype(jnp.float32)
    B = jobs.shape[0]

    # Contiguous reshapes only (no concat, no pad, no extra HBM traffic).
    jobs_flat = jobs.reshape(B, -1)
    gpu_flat = gpu_left.reshape(B, -1)

    dj = jobs_flat.shape[1]
    dc = cluster.shape[1]
    dg = gpu_flat.shape[1]
    enc_out = packed["w1"].shape[0]
    hidden = packed["w1"].shape[1]
    G = packed["pool"].shape[1]

    # Tile selection: divide B nearly evenly (avoid up-to-2x padding waste),
    # guarantee >= 2 grid steps for B >= 16 so v7x's two TensorCores both get
    # work, and never exceed batch_tile.  The last tile may be ragged; Pallas
    # pads OOB reads and drops OOB writes, so no explicit padding is needed.
    n_tiles = max(_cdiv(B, batch_tile), 2 if B >= 16 else 1)
    bt = _round_up(_cdiv(B, n_tiles), 8)
    n_tiles = _cdiv(B, bt)
    grid = (n_tiles,)

    out = pl.pallas_call(
        critic_kernel,
        out_shape=jax.ShapeDtypeStruct((B, 1), jnp.float32),
        grid=grid,
        in_specs=[
            pl.BlockSpec((bt, dj), lambda i: (i, 0)),       # jobs (batch-tiled)
            pl.BlockSpec((bt, dc), lambda i: (i, 0)),       # cluster
            pl.BlockSpec((bt, dg), lambda i: (i, 0)),       # gpu_left
            _param_spec((dj, enc_out)),                     # wj_full
            _param_spec((dc, enc_out)),                     # wc_full
            _param_spec((dg, enc_out)),                     # wg_full
            _param_spec((enc_out, G)),                      # pool
            _param_spec((G, enc_out)),                      # bcast
            _param_spec((4, enc_out)),                      # vecs
            _param_spec((enc_out, hidden)),                 # w1
            _param_spec((3, hidden)),                       # head
        ],
        out_specs=pl.BlockSpec((bt, 1), lambda i: (i, 0)),
        compiler_params=pltpu.CompilerParams(
            dimension_semantics=("parallel",),
            vmem_limit_bytes=_vmem_limit_bytes(bt, (dj, dc, dg), enc_out, hidden, G),
        ),
    )(jobs_flat, cluster, gpu_flat,
      packed["wj_full"], packed["wc_full"], packed["wg_full"],
      packed["pool"], packed["bcast"], packed["vecs"],
      packed["w1"], packed["head"])

    return out


# -----------------------------------------------------------------------------
# Plain-JAX reference (matches the PyTorch forward)
# -----------------------------------------------------------------------------
def critic_reference(state, params, *, max_jobs):
    jobs = state["jobs"].astype(jnp.float32)
    cluster = state["cluster"].astype(jnp.float32)
    gpu_left = state["gpu_left"].astype(jnp.float32)
    B = jobs.shape[0]

    def ln(z, g, b):
        mu = jnp.mean(z, -1, keepdims=True)
        var = jnp.mean((z - mu) ** 2, -1, keepdims=True)
        return (z - mu) / jnp.sqrt(var + LN_EPS) * g + b

    with jax.default_matmul_precision("highest"):
        jf = jobs.reshape(-1, 5) @ params["wj"] + params["bj"]
        jf = jnp.maximum(ln(jf, params["gj"], params["betaj"]), 0.0)
        jf = jf.reshape(B, max_jobs * 16)

        cf = cluster @ params["wc"] + params["bc"]
        cf = jnp.maximum(ln(cf, params["gc"], params["betac"]), 0.0)

        gf = jnp.maximum(gpu_left.reshape(B, -1) @ params["wg"] + params["bg"], 0.0)

        xcat = jnp.concatenate([jf, cf, gf], axis=1)
        h = jnp.maximum(xcat @ params["w1"] + params["b1"], 0.0)
        return h @ params["w2"] + params["b2"]


if __name__ == "__main__":
    num_nodes, num_gpus, max_jobs, hidden_dim = 4, 4, 4, 32

    key = jax.random.PRNGKey(0)
    kp = jax.random.fold_in(key, 1)
    params = init_params(kp, num_nodes, num_gpus, max_jobs, hidden_dim)
    packed = pack_params(params, num_nodes, num_gpus, max_jobs, hidden_dim)

    # B=8  : single tile.
    # B=37 : two grid steps with a ragged last tile (exercises OOB handling).
    for B in (8, 37):
        kj, kc, kg = jax.random.split(jax.random.fold_in(key, 100 + B), 3)
        state = {
            "jobs": jax.random.normal(kj, (B, max_jobs, 5), jnp.float32),
            "cluster": jax.random.normal(kc, (B, num_nodes), jnp.float32),
            "gpu_left": jax.random.normal(kg, (B, num_nodes, num_gpus), jnp.float32),
        }

        out = jax.block_until_ready(critic_forward(state, packed))
        ref = critic_reference(state, params, max_jobs=max_jobs)

        assert out.shape == (B, 1), out.shape
        assert jnp.allclose(out, ref, atol=2e-4, rtol=2e-4), (B, out, ref)

    print("KERNEL_OK")
</pallas_src>

<mosaic_0001>
module attributes {stable_mosaic.version = 11 : i64} {
  func.func @critic_kernel(%arg0: i32, %arg1: memref<8x20xf32, #tpu.memory_space<vmem>>, %arg2: memref<8x4xf32, #tpu.memory_space<vmem>>, %arg3: memref<8x16xf32, #tpu.memory_space<vmem>>, %arg4: memref<20x96xf32, #tpu.memory_space<vmem>>, %arg5: memref<4x96xf32, #tpu.memory_space<vmem>>, %arg6: memref<16x96xf32, #tpu.memory_space<vmem>>, %arg7: memref<96x5xf32, #tpu.memory_space<vmem>>, %arg8: memref<5x96xf32, #tpu.memory_space<vmem>>, %arg9: memref<4x96xf32, #tpu.memory_space<vmem>>, %arg10: memref<96x32xf32, #tpu.memory_space<vmem>>, %arg11: memref<3x32xf32, #tpu.memory_space<vmem>>, %arg12: memref<8x1xf32, #tpu.memory_space<vmem>>) attributes {dimension_semantics = [#tpu.dimension_semantics<parallel>], iteration_bounds = array<i64: 1>, scalar_prefetch = 0 : i64, scratch_operands = 0 : i64, tpu.core_type = #tpu.core_type<tc>, window_params = [{transform_indices = @transform_0, window_bounds = array<i64: 8, 20>}, {transform_indices = @transform_1, window_bounds = array<i64: 8, 4>}, {transform_indices = @transform_2, window_bounds = array<i64: 8, 16>}, {pipeline_mode = #tpu.pipeline_mode<synchronous>, transform_indices = @transform_3, window_bounds = array<i64: 20, 96>}, {pipeline_mode = #tpu.pipeline_mode<synchronous>, transform_indices = @transform_4, window_bounds = array<i64: 4, 96>}, {pipeline_mode = #tpu.pipeline_mode<synchronous>, transform_indices = @transform_5, window_bounds = array<i64: 16, 96>}, {pipeline_mode = #tpu.pipeline_mode<synchronous>, transform_indices = @transform_6, window_bounds = array<i64: 96, 5>}, {pipeline_mode = #tpu.pipeline_mode<synchronous>, transform_indices = @transform_7, window_bounds = array<i64: 5, 96>}, {pipeline_mode = #tpu.pipeline_mode<synchronous>, transform_indices = @transform_8, window_bounds = array<i64: 4, 96>}, {pipeline_mode = #tpu.pipeline_mode<synchronous>, transform_indices = @transform_9, window_bounds = array<i64: 96, 32>}, {pipeline_mode = #tpu.pipeline_mode<synchronous>, transform_indices = @transform_10, window_bounds = array<i64: 3, 32>}, {transform_indices = @transform_11, window_bounds = array<i64: 8, 1>}]} {
    %c0 = arith.constant 0 : index
    %c0_0 = arith.constant 0 : index
    %0 = vector.load %arg9[%c0, %c0_0] : memref<4x96xf32, #tpu.memory_space<vmem>>, vector<1x96xf32>
    %c1 = arith.constant 1 : index
    %c0_1 = arith.constant 0 : index
    %1 = vector.load %arg9[%c1, %c0_1] : memref<4x96xf32, #tpu.memory_space<vmem>>, vector<1x96xf32>
    %c2 = arith.constant 2 : index
    %c0_2 = arith.constant 0 : index
    %2 = vector.load %arg9[%c2, %c0_2] : memref<4x96xf32, #tpu.memory_space<vmem>>, vector<1x96xf32>
    %c3 = arith.constant 3 : index
    %c0_3 = arith.constant 0 : index
    %3 = vector.load %arg9[%c3, %c0_3] : memref<4x96xf32, #tpu.memory_space<vmem>>, vector<1x96xf32>
    %c0_4 = arith.constant 0 : index
    %c0_5 = arith.constant 0 : index
    %4 = vector.load %arg1[%c0_4, %c0_5] : memref<8x20xf32, #tpu.memory_space<vmem>>, vector<8x20xf32>
    %c0_6 = arith.constant 0 : index
    %c0_7 = arith.constant 0 : index
    %5 = vector.load %arg4[%c0_6, %c0_7] : memref<20x96xf32, #tpu.memory_space<vmem>>, vector<20x96xf32>
    %cst = arith.constant dense<0.000000e+00> : vector<8x96xf32>
    %6 = tpu.matmul %4, %5, %cst {dimension_numbers = #tpu.dot_dimension_numbers<[1], [0], [0], [1], [0, 0, 1, 1], [], []>} : vector<8x20xf32>, vector<20x96xf32>, vector<8x96xf32> -> vector<8x96xf32>
    %c0_8 = arith.constant 0 : index
    %c0_9 = arith.constant 0 : index
    %7 = vector.load %arg2[%c0_8, %c0_9] : memref<8x4xf32, #tpu.memory_space<vmem>>, vector<8x4xf32>
    %c0_10 = arith.constant 0 : index
    %c0_11 = arith.constant 0 : index
    %8 = vector.load %arg5[%c0_10, %c0_11] : memref<4x96xf32, #tpu.memory_space<vmem>>, vector<4x96xf32>
    %cst_12 = arith.constant dense<0.000000e+00> : vector<8x96xf32>
    %9 = tpu.matmul %7, %8, %cst_12 {dimension_numbers = #tpu.dot_dimension_numbers<[1], [0], [0], [1], [0, 0, 1, 1], [], []>} : vector<8x4xf32>, vector<4x96xf32>, vector<8x96xf32> -> vector<8x96xf32>
    %10 = arith.addf %6, %9 : vector<8x96xf32>
    %c0_13 = arith.constant 0 : index
    %c0_14 = arith.constant 0 : index
    %11 = vector.load %arg3[%c0_13, %c0_14] : memref<8x16xf32, #tpu.memory_space<vmem>>, vector<8x16xf32>
    %c0_15 = arith.constant 0 : index
    %c0_16 = arith.constant 0 : index
    %12 = vector.load %arg6[%c0_15, %c0_16] : memref<16x96xf32, #tpu.memory_space<vmem>>, vector<16x96xf32>
    %cst_17 = arith.constant dense<0.000000e+00> : vector<8x96xf32>
    %13 = tpu.matmul %11, %12, %cst_17 {dimension_numbers = #tpu.dot_dimension_numbers<[1], [0], [0], [1], [0, 0, 1, 1], [], []>} : vector<8x16xf32>, vector<16x96xf32>, vector<8x96xf32> -> vector<8x96xf32>
    %14 = arith.addf %10, %13 : vector<8x96xf32>
    %15 = vector.broadcast %0 : vector<1x96xf32> to vector<8x96xf32>
    %16 = arith.addf %14, %15 : vector<8x96xf32>
    %c0_18 = arith.constant 0 : index
    %c0_19 = arith.constant 0 : index
    %17 = vector.load %arg7[%c0_18, %c0_19] : memref<96x5xf32, #tpu.memory_space<vmem>>, vector<96x5xf32>
    %c0_20 = arith.constant 0 : index
    %c0_21 = arith.constant 0 : index
    %18 = vector.load %arg8[%c0_20, %c0_21] : memref<5x96xf32, #tpu.memory_space<vmem>>, vector<5x96xf32>
    %cst_22 = arith.constant dense<0.000000e+00> : vector<8x5xf32>
    %19 = tpu.matmul %16, %17, %cst_22 {dimension_numbers = #tpu.dot_dimension_numbers<[1], [0], [0], [1], [0, 0, 1, 1], [], []>} : vector<8x96xf32>, vector<96x5xf32>, vector<8x5xf32> -> vector<8x5xf32>
    %20 = arith.mulf %16, %16 : vector<8x96xf32>
    %cst_23 = arith.constant dense<0.000000e+00> : vector<8x5xf32>
    %21 = tpu.matmul %20, %17, %cst_23 {dimension_numbers = #tpu.dot_dimension_numbers<[1], [0], [0], [1], [0, 0, 1, 1], [], []>} : vector<8x96xf32>, vector<96x5xf32>, vector<8x5xf32> -> vector<8x5xf32>
    %22 = arith.mulf %19, %19 : vector<8x5xf32>
    %23 = arith.subf %21, %22 : vector<8x5xf32>
    %cst_24 = arith.constant dense<0.000000e+00> : vector<8x96xf32>
    %24 = tpu.matmul %19, %18, %cst_24 {dimension_numbers = #tpu.dot_dimension_numbers<[1], [0], [0], [1], [0, 0, 1, 1], [], []>} : vector<8x5xf32>, vector<5x96xf32>, vector<8x96xf32> -> vector<8x96xf32>
    %cst_25 = arith.constant dense<0.000000e+00> : vector<8x96xf32>
    %25 = tpu.matmul %23, %18, %cst_25 {dimension_numbers = #tpu.dot_dimension_numbers<[1], [0], [0], [1], [0, 0, 1, 1], [], []>} : vector<8x5xf32>, vector<5x96xf32>, vector<8x96xf32> -> vector<8x96xf32>
    %26 = arith.subf %16, %24 : vector<8x96xf32>
    %cst_26 = arith.constant 9.99999974E-6 : f32
    %27 = vector.broadcast %cst_26 : f32 to vector<8x96xf32>
    %28 = arith.addf %25, %27 : vector<8x96xf32>
    %29 = math.rsqrt %28 : vector<8x96xf32>
    %30 = arith.mulf %26, %29 : vector<8x96xf32>
    %31 = vector.broadcast %1 : vector<1x96xf32> to vector<8x96xf32>
    %32 = arith.mulf %30, %31 : vector<8x96xf32>
    %33 = vector.broadcast %3 : vector<1x96xf32> to vector<8x96xf32>
    %34 = arith.mulf %16, %33 : vector<8x96xf32>
    %35 = arith.addf %32, %34 : vector<8x96xf32>
    %36 = vector.broadcast %2 : vector<1x96xf32> to vector<8x96xf32>
    %37 = arith.addf %35, %36 : vector<8x96xf32>
    %cst_27 = arith.constant 0.000000e+00 : f32
    %38 = vector.broadcast %cst_27 : f32 to vector<8x96xf32>
    %39 = arith.maximumf %37, %38 : vector<8x96xf32>
    %c0_28 = arith.constant 0 : index
    %c0_29 = arith.constant 0 : index
    %40 = vector.load %arg10[%c0_28, %c0_29] : memref<96x32xf32, #tpu.memory_space<vmem>>, vector<96x32xf32>
    %cst_30 = arith.constant dense<0.000000e+00> : vector<8x32xf32>
    %41 = tpu.matmul %39, %40, %cst_30 {dimension_numbers = #tpu.dot_dimension_numbers<[1], [0], [0], [1], [0, 0, 1, 1], [], []>} : vector<8x96xf32>, vector<96x32xf32>, vector<8x32xf32> -> vector<8x32xf32>
    %c0_31 = arith.constant 0 : index
    %c0_32 = arith.constant 0 : index
    %42 = vector.load %arg11[%c0_31, %c0_32] : memref<3x32xf32, #tpu.memory_space<vmem>>, vector<1x32xf32>
    %43 = vector.broadcast %42 : vector<1x32xf32> to vector<8x32xf32>
    %44 = arith.addf %41, %43 : vector<8x32xf32>
    %cst_33 = arith.constant 0.000000e+00 : f32
    %45 = vector.broadcast %cst_33 : f32 to vector<8x32xf32>
    %46 = arith.maximumf %44, %45 : vector<8x32xf32>
    %c1_34 = arith.constant 1 : index
    %c0_35 = arith.constant 0 : index
    %47 = vector.load %arg11[%c1_34, %c0_35] : memref<3x32xf32, #tpu.memory_space<vmem>>, vector<1x32xf32>
    %48 = vector.broadcast %47 : vector<1x32xf32> to vector<8x32xf32>
    %49 = arith.mulf %46, %48 : vector<8x32xf32>
    %cst_36 = arith.constant dense<0.000000e+00> : vector<8xf32>
    %50 = vector.multi_reduction <add>, %49, %cst_36 [1] : vector<8x32xf32> to vector<8xf32>
    %51 = vector.shape_cast %50 : vector<8xf32> to vector<8x1xf32>
    %c2_37 = arith.constant 2 : index
    %c0_38 = arith.constant 0 : index
    %52 = vector.load %arg11[%c2_37, %c0_38] : memref<3x32xf32, #tpu.memory_space<vmem>>, vector<1x1xf32>
    %53 = vector.broadcast %52 : vector<1x1xf32> to vector<8x1xf32>
    %54 = arith.addf %51, %53 : vector<8x1xf32>
    %c0_39 = arith.constant 0 : index
    %c0_40 = arith.constant 0 : index
    %55 = vector.load %arg12[%c0_39, %c0_40] : memref<8x1xf32, #tpu.memory_space<vmem>>, vector<8x1xf32>
    tpu.vector_store %arg12[%c0_39, %c0_40], %54 {strides = array<i32>} : memref<8x1xf32, #tpu.memory_space<vmem>>, vector<8x1xf32>,
    return
  }
  func.func @transform_0(%arg0: i32) -> (i32, i32) {
    %c0_i32 = arith.constant 0 : i32
    %c0_i32_0 = arith.constant 0 : i32
    return %arg0, %c0_i32 : i32, i32
  }
  func.func @transform_1(%arg0: i32) -> (i32, i32) {
    %c0_i32 = arith.constant 0 : i32
    %c0_i32_0 = arith.constant 0 : i32
    return %arg0, %c0_i32 : i32, i32
  }
  func.func @transform_2(%arg0: i32) -> (i32, i32) {
    %c0_i32 = arith.constant 0 : i32
    %c0_i32_0 = arith.constant 0 : i32
    return %arg0, %c0_i32 : i32, i32
  }
  func.func @transform_3(%arg0: i32) -> (i32, i32) {
    %c0_i32 = arith.constant 0 : i32
    %c0_i32_0 = arith.constant 0 : i32
    %c0_i32_1 = arith.constant 0 : i32
    return %c0_i32, %c0_i32_0 : i32, i32
  }
  func.func @transform_4(%arg0: i32) -> (i32, i32) {
    %c0_i32 = arith.constant 0 : i32
    %c0_i32_0 = arith.constant 0 : i32
    %c0_i32_1 = arith.constant 0 : i32
    return %c0_i32, %c0_i32_0 : i32, i32
  }
  func.func @transform_5(%arg0: i32) -> (i32, i32) {
    %c0_i32 = arith.constant 0 : i32
    %c0_i32_0 = arith.constant 0 : i32
    %c0_i32_1 = arith.constant 0 : i32
    return %c0_i32, %c0_i32_0 : i32, i32
  }
  func.func @transform_6(%arg0: i32) -> (i32, i32) {
    %c0_i32 = arith.constant 0 : i32
    %c0_i32_0 = arith.constant 0 : i32
    %c0_i32_1 = arith.constant 0 : i32
    return %c0_i32, %c0_i32_0 : i32, i32
  }
  func.func @transform_7(%arg0: i32) -> (i32, i32) {
    %c0_i32 = arith.constant 0 : i32
    %c0_i32_0 = arith.constant 0 : i32
    %c0_i32_1 = arith.constant 0 : i32
    return %c0_i32, %c0_i32_0 : i32, i32
  }
  func.func @transform_8(%arg0: i32) -> (i32, i32) {
    %c0_i32 = arith.constant 0 : i32
    %c0_i32_0 = arith.constant 0 : i32
    %c0_i32_1 = arith.constant 0 : i32
    return %c0_i32, %c0_i32_0 : i32, i32
  }
  func.func @transform_9(%arg0: i32) -> (i32, i32) {
    %c0_i32 = arith.constant 0 : i32
    %c0_i32_0 = arith.constant 0 : i32
    %c0_i32_1 = arith.constant 0 : i32
    return %c0_i32, %c0_i32_0 : i32, i32
  }
  func.func @transform_10(%arg0: i32) -> (i32, i32) {
    %c0_i32 = arith.constant 0 : i32
    %c0_i32_0 = arith.constant 0 : i32
    %c0_i32_1 = arith.constant 0 : i32
    return %c0_i32, %c0_i32_0 : i32, i32
  }
  func.func @transform_11(%arg0: i32) -> (i32, i32) {
    %c0_i32 = arith.constant 0 : i32
    %c0_i32_0 = arith.constant 0 : i32
    return %arg0, %c0_i32 : i32, i32
  }
}

</mosaic_0001>

<llo_original>
// kernel: tpu_custom_call.1
$region0: #{tpu_custom_call.1}
  #allocation0 [shape = 'u32[]', space=smem, size = 0x4, offset = 0x4, fixed_abs, tag = 'smem constant byte address 0x4 - core index']
  #allocation1 [shape = 'u32[144,128]{1,0:T(1,128)}', space=vmem, size = 0x12000, scoped, tag = 'internal scratch']
  %s0 = inlined_call_operand.vmem [shape: f32[8,20], index: 0, kind: input, shape index: {}]
  %s1 = inlined_call_operand.vmem [shape: f32[8,4], index: 1, kind: input, shape index: {}]
  %s2 = inlined_call_operand.vmem [shape: f32[8,16], index: 2, kind: input, shape index: {}]
  %s3 = inlined_call_operand.vmem [shape: f32[20,96], index: 3, kind: input, shape index: {}]
  %s4 = inlined_call_operand.vmem [shape: f32[4,96], index: 4, kind: input, shape index: {}]
  %s5 = inlined_call_operand.vmem [shape: f32[16,96], index: 5, kind: input, shape index: {}]
  %s6 = inlined_call_operand.vmem [shape: f32[96,5], index: 6, kind: input, shape index: {}]
  %s7 = inlined_call_operand.vmem [shape: f32[5,96], index: 7, kind: input, shape index: {}]
  %s8 = inlined_call_operand.vmem [shape: f32[4,96], index: 8, kind: input, shape index: {}]
  %s9 = inlined_call_operand.vmem [shape: f32[96,32], index: 9, kind: input, shape index: {}]
  %s10 = inlined_call_operand.vmem [shape: f32[3,32], index: 10, kind: input, shape index: {}]
  %s11 = inlined_call_operand.vmem [shape: f32[8,1], index: 11, kind: output, shape index: {}]
  %s12 = sld [smem:[#allocation0]]
  $region54: #{tpu_custom_call.1} parent=0
    _
  %s14 = ssub.s32 1, %s12
  %s15 = scalar_select 0, %s14, %s12
  // Predicated region
  $region2: #{tpu_custom_call.1} parent=0 // pred_check
    _
  $region3: #{tpu_custom_call.1} parent=0 // pred_check_branch
    %17 = sbr.rel (0) target = $region5
  $region4: #{tpu_custom_call.1} parent=0 // pred_region
    _
  $region5: #{tpu_custom_call.1} parent=0 // pred_fallthru
    _
  // Predicated region
  $region6: #{tpu_custom_call.1} parent=0 // pred_check
    _
  $region7: #{tpu_custom_call.1} parent=0 // pred_check_branch
    %19 = sbr.rel (0) target = $region9
  $region8: #{tpu_custom_call.1} parent=0 // pred_region
    _
  $region9: #{tpu_custom_call.1} parent=0 // pred_fallthru
    _
  // Predicated region
  $region10: #{tpu_custom_call.1} parent=0 // pred_check
    _
  $region11: #{tpu_custom_call.1} parent=0 // pred_check_branch
    %21 = sbr.rel (0) target = $region13
  $region12: #{tpu_custom_call.1} parent=0 // pred_region
    _
  $region13: #{tpu_custom_call.1} parent=0 // pred_fallthru
    _
  // Predicated region
  $region14: #{tpu_custom_call.1} parent=0 // pred_check
    _
  $region15: #{tpu_custom_call.1} parent=0 // pred_check_branch
    %23 = sbr.rel (0) target = $region17
  $region16: #{tpu_custom_call.1} parent=0 // pred_region
    _
  $region17: #{tpu_custom_call.1} parent=0 // pred_fallthru
    _
  // Predicated region
  $region18: #{tpu_custom_call.1} parent=0 // pred_check
    _
  $region19: #{tpu_custom_call.1} parent=0 // pred_check_branch
    %25 = sbr.rel (0) target = $region21
  $region20: #{tpu_custom_call.1} parent=0 // pred_region
    _
  $region21: #{tpu_custom_call.1} parent=0 // pred_fallthru
    _
  // Predicated region
  $region22: #{tpu_custom_call.1} parent=0 // pred_check
    _
  $region23: #{tpu_custom_call.1} parent=0 // pred_check_branch
    %27 = sbr.rel (0) target = $region25
  $region24: #{tpu_custom_call.1} parent=0 // pred_region
    _
  $region25: #{tpu_custom_call.1} parent=0 // pred_fallthru
    _
  // Predicated region
  $region26: #{tpu_custom_call.1} parent=0 // pred_check
    _
  $region27: #{tpu_custom_call.1} parent=0 // pred_check_branch
    %29 = sbr.rel (0) target = $region29
  $region28: #{tpu_custom_call.1} parent=0 // pred_region
    _
  $region29: #{tpu_custom_call.1} parent=0 // pred_fallthru
    _
  // Predicated region
  $region30: #{tpu_custom_call.1} parent=0 // pred_check
    _
  $region31: #{tpu_custom_call.1} parent=0 // pred_check_branch
    %31 = sbr.rel (0) target = $region33
  $region32: #{tpu_custom_call.1} parent=0 // pred_region
    _
  $region33: #{tpu_custom_call.1} parent=0 // pred_fallthru
    _
  // Predicated region
  $region34: #{tpu_custom_call.1} parent=0 // pred_check
    _
  $region35: #{tpu_custom_call.1} parent=0 // pred_check_branch
    %33 = sbr.rel (0) target = $region37
  $region36: #{tpu_custom_call.1} parent=0 // pred_region
    _
  $region37: #{tpu_custom_call.1} parent=0 // pred_fallthru
    _
  // Predicated region
  $region38: #{tpu_custom_call.1} parent=0 // pred_check
    _
  $region39: #{tpu_custom_call.1} parent=0 // pred_check_branch
    %35 = sbr.rel (0) target = $region41
  $region40: #{tpu_custom_call.1} parent=0 // pred_region
    _
  $region41: #{tpu_custom_call.1} parent=0 // pred_fallthru
    _
  // Predicated region
  $region42: #{tpu_custom_call.1} parent=0 // pred_check
    _
  $region43: #{tpu_custom_call.1} parent=0 // pred_check_branch
    %37 = sbr.rel (0) target = $region45
  $region44: #{tpu_custom_call.1} parent=0 // pred_region
    _
  $region45: #{tpu_custom_call.1} parent=0 // pred_fallthru
    _
  %v38 = vld [vmem:[%s8] sm:$0x1]
  %v39 = vld [vmem:[%s8 + $0x1] sm:$0x1]
  %v40 = vld [vmem:[%s8 + $0x2] sm:$0x1]
  %v41 = vld [vmem:[%s8 + $0x3] sm:$0x1]
  %v42 = vld [vmem:[%s0] sm:$0xff]
  %v43 = vld [vmem:[%s3] sm:$0xff]
  %v44 = vld [vmem:[%s3 + $0x8] sm:$0xff]
  %v45 = vld [vmem:[%s3 + $0x10] sm:$0xf]
  %v46 = vld [vmem:[%s1] sm:$0xff]
  %v47 = vld [vmem:[%s4] sm:$0xf]
  %vm48 = vcmask 31744
  %v50 = vsel %vm48, %v46, 0
  %vm52 = vcmask 1043456
  %v54 = vsel %vm52, %v47, 0
  %56 = vmatprep.subr.mxu0 0.0
  %57 = vmatpush1.msra.mxu0 %v54
  %58 = vmatprep.subr.mxu0 0.0
  %59 = vmatpush1.msra.mxu0 0.0
  %60 = vmatprep.subr.mxu0 0.0
  %61 = vmatpush1.msra.mxu0 0.0
  %62 = vmatprep.subr.mxu0 0.0
  %63 = vmatpush1.msra.mxu0 0.0
  %64 = vmatprep.subr.mxu0 0.0
  %65 = vmatpush1.msra.mxu0 0.0
  %66 = vmatprep.subr.mxu0 0.0
  %67 = vmatpush1.msra.mxu0 0.0
  %68 = vmatprep.subr.mxu0 0.0
  %69 = vmatpush1.msra.mxu0 0.0
  %70 = vmatprep.subr.mxu0 0.0
  %71 = vmatpush1.msra.mxu0 0.0
  %72 = vmatprep.subr.mxu0 0.0
  %73 = vmatpush1.msra.mxu0 0.0
  %74 = vmatprep.subr.mxu0 0.0
  %75 = vmatpush1.msra.mxu0 0.0
  %76 = vmatprep.subr.mxu0 0.0
  %77 = vmatpush1.msra.mxu0 0.0
  %78 = vmatprep.subr.mxu0 0.0
  %79 = vmatpush1.msra.mxu0 0.0
  %80 = vmatprep.subr.mxu0 0.0
  %81 = vmatpush1.msra.mxu0 0.0
  %82 = vmatprep.subr.mxu0 0.0
  %83 = vmatpush1.msra.mxu0 0.0
  %84 = vmatprep.subr.mxu0 0.0
  %85 = vmatpush1.msra.mxu0 0.0
  %86 = vmatprep.subr.mxu0 0.0
  %87 = vmatpush1.msra.mxu0 0.0
  %88 = vmatprep.subr.mxu0 0.0
  %89 = vmatpush1.msra.mxu0 0.0
  %90 = vmatprep.subr.mxu0 0.0
  %91 = vmatpush1.msra.mxu0 0.0
  %92 = vmatprep.subr.mxu0 0.0
  %93 = vmatpush1.msra.mxu0 0.0
  %94 = vmatprep.subr.mxu0 0.0
  %95 = vmatpush1.msra.mxu0 0.0
  %96 = vmatprep.subr.mxu0 0.0
  %97 = vmatpush1.msra.mxu0 0.0
  %98 = vmatprep.subr.mxu0 0.0
  %99 = vmatpush1.msra.mxu0 0.0
  %100 = vmatprep.subr.mxu0 0.0
  %101 = vmatpush1.msra.mxu0 0.0
  %102 = vmatprep.subr.mxu0 0.0
  %103 = vmatpush1.msra.mxu0 0.0
  %104 = vmatprep.subr.mxu0 0.0
  %105 = vmatpush1.msra.mxu0 0.0
  %106 = vmatprep.subr.mxu0 0.0
  %107 = vmatpush1.msra.mxu0 0.0
  %108 = vmatprep.subr.mxu0 0.0
  %109 = vmatpush1.msra.mxu0 0.0
  %110 = vmatprep.subr.mxu0 0.0
  %111 = vmatpush1.msra.mxu0 0.0
  %112 = vmatprep.subr.mxu0 0.0
  %113 = vmatpush1.msra.mxu0 0.0
  %114 = vmatprep.subr.mxu0 0.0
  %115 = vmatpush1.msra.mxu0 0.0
  %116 = vmatprep.subr.mxu0 0.0
  %117 = vmatpush1.msra.mxu0 0.0
  %118 = vmatprep.subr.mxu0 0.0
  %119 = vmatpush1.msra.mxu0 0.0
  %120 = vmatprep.mubr.f32.mxu0 0.0
  %121 = vmatmul.mubr.f32.gmra.mrb[0].mxu0 %v50
  %v122 = vpop.f32.mrb[0].mxu0
  %v123 = vadd.f32 0.0, %v122
  %v124 = vpop.f32.mrb[0].mxu0
  %125 = vdwg.mxu0
  %vm126 = vcmask 162816
  %v128 = vsel %vm126, %v42, 0
  %v131 = vsel %vm52, %v45, 0
  %133 = vmatprep.subr.mxu0 0.0
  %134 = vmatpush1.msra.mxu0 %v43
  %135 = vmatprep.subr.mxu0 0.0
  %136 = vmatpush1.msra.mxu0 %v44
  %137 = vmatprep.subr.mxu0 0.0
  %138 = vmatpush1.msra.mxu0 %v131
  %139 = vmatprep.subr.mxu0 0.0
  %140 = vmatpush1.msra.mxu0 0.0
  %141 = vmatprep.subr.mxu0 0.0
  %142 = vmatpush1.msra.mxu0 0.0
  %143 = vmatprep.subr.mxu0 0.0
  %144 = vmatpush1.msra.mxu0 0.0
  %145 = vmatprep.subr.mxu0 0.0
  %146 = vmatpush1.msra.mxu0 0.0
  %147 = vmatprep.subr.mxu0 0.0
  %148 = vmatpush1.msra.mxu0 0.0
  %149 = vmatprep.subr.mxu0 0.0
  %150 = vmatpush1.msra.mxu0 0.0
  %151 = vmatprep.subr.mxu0 0.0
  %152 = vmatpush1.msra.mxu0 0.0
  %153 = vmatprep.subr.mxu0 0.0
  %154 = vmatpush1.msra.mxu0 0.0
  %155 = vmatprep.subr.mxu0 0.0
  %156 = vmatpush1.msra.mxu0 0.0
  %157 = vmatprep.subr.mxu0 0.0
  %158 = vmatpush1.msra.mxu0 0.0
  %159 = vmatprep.subr.mxu0 0.0
  %160 = vmatpush1.msra.mxu0 0.0
  %161 = vmatprep.subr.mxu0 0.0
  %162 = vmatpush1.msra.mxu0 0.0
  %163 = vmatprep.subr.mxu0 0.0
  %164 = vmatpush1.msra.mxu0 0.0
  %165 = vmatprep.subr.mxu0 0.0
  %166 = vmatpush1.msra.mxu0 0.0
  %167 = vmatprep.subr.mxu0 0.0
  %168 = vmatpush1.msra.mxu0 0.0
  %169 = vmatprep.subr.mxu0 0.0
  %170 = vmatpush1.msra.mxu0 0.0
  %171 = vmatprep.subr.mxu0 0.0
  %172 = vmatpush1.msra.mxu0 0.0
  %173 = vmatprep.subr.mxu0 0.0
  %174 = vmatpush1.msra.mxu0 0.0
  %175 = vmatprep.subr.mxu0 0.0
  %176 = vmatpush1.msra.mxu0 0.0
  %177 = vmatprep.subr.mxu0 0.0
  %178 = vmatpush1.msra.mxu0 0.0
  %179 = vmatprep.subr.mxu0 0.0
  %180 = vmatpush1.msra.mxu0 0.0
  %181 = vmatprep.subr.mxu0 0.0
  %182 = vmatpush1.msra.mxu0 0.0
  %183 = vmatprep.subr.mxu0 0.0
  %184 = vmatpush1.msra.mxu0 0.0
  %185 = vmatprep.subr.mxu0 0.0
  %186 = vmatpush1.msra.mxu0 0.0
  %187 = vmatprep.subr.mxu0 0.0
  %188 = vmatpush1.msra.mxu0 0.0
  %189 = vmatprep.subr.mxu0 0.0
  %190 = vmatpush1.msra.mxu0 0.0
  %191 = vmatprep.subr.mxu0 0.0
  %192 = vmatpush1.msra.mxu0 0.0
  %193 = vmatprep.subr.mxu0 0.0
  %194 = vmatpush1.msra.mxu0 0.0
  %195 = vmatprep.subr.mxu0 0.0
  %196 = vmatpush1.msra.mxu0 0.0
  %197 = vmatprep.mubr.f32.mxu0 0.0
  %198 = vmatmul.mubr.f32.gmra.mrb[0].mxu0 %v128
  %v199 = vpop.f32.mrb[0].mxu0
  %v200 = vadd.f32 %v123, %v199
  %v201 = vpop.f32.mrb[0].mxu0
  %202 = vdwg.mxu0
  %v203 = vld [vmem:[%s2] sm:$0xff]
  %v204 = vld [vmem:[%s5] sm:$0xff]
  %v205 = vld [vmem:[%s5 + $0x8] sm:$0xff]
  %vm206 = vcmask 130048
  %v208 = vsel %vm206, %v203, 0
  %210 = vmatprep.subr.mxu0 0.0
  %211 = vmatpush1.msra.mxu0 %v204
  %212 = vmatprep.subr.mxu0 0.0
  %213 = vmatpush1.msra.mxu0 %v205
  %214 = vmatprep.subr.mxu0 0.0
  %215 = vmatpush1.msra.mxu0 0.0
  %216 = vmatprep.subr.mxu0 0.0
  %217 = vmatpush1.msra.mxu0 0.0
  %218 = vmatprep.subr.mxu0 0.0
  %219 = vmatpush1.msra.mxu0 0.0
  %220 = vmatprep.subr.mxu0 0.0
  %221 = vmatpush1.msra.mxu0 0.0
  %222 = vmatprep.subr.mxu0 0.0
  %223 = vmatpush1.msra.mxu0 0.0
  %224 = vmatprep.subr.mxu0 0.0
  %225 = vmatpush1.msra.mxu0 0.0
  %226 = vmatprep.subr.mxu0 0.0
  %227 = vmatpush1.msra.mxu0 0.0
  %228 = vmatprep.subr.mxu0 0.0
  %229 = vmatpush1.msra.mxu0 0.0
  %230 = vmatprep.subr.mxu0 0.0
  %231 = vmatpush1.msra.mxu0 0.0
  %232 = vmatprep.subr.mxu0 0.0
  %233 = vmatpush1.msra.mxu0 0.0
  %234 = vmatprep.subr.mxu0 0.0
  %235 = vmatpush1.msra.mxu0 0.0
  %236 = vmatprep.subr.mxu0 0.0
  %237 = vmatpush1.msra.mxu0 0.0
  %238 = vmatprep.subr.mxu0 0.0
  %239 = vmatpush1.msra.mxu0 0.0
  %240 = vmatprep.subr.mxu0 0.0
  %241 = vmatpush1.msra.mxu0 0.0
  %242 = vmatprep.subr.mxu0 0.0
  %243 = vmatpush1.msra.mxu0 0.0
  %244 = vmatprep.subr.mxu0 0.0
  %245 = vmatpush1.msra.mxu0 0.0
  %246 = vmatprep.subr.mxu0 0.0
  %247 = vmatpush1.msra.mxu0 0.0
  %248 = vmatprep.subr.mxu0 0.0
  %249 = vmatpush1.msra.mxu0 0.0
  %250 = vmatprep.subr.mxu0 0.0
  %251 = vmatpush1.msra.mxu0 0.0
  %252 = vmatprep.subr.mxu0 0.0
  %253 = vmatpush1.msra.mxu0 0.0
  %254 = vmatprep.subr.mxu0 0.0
  %255 = vmatpush1.msra.mxu0 0.0
  %256 = vmatprep.subr.mxu0 0.0
  %257 = vmatpush1.msra.mxu0 0.0
  %258 = vmatprep.subr.mxu0 0.0
  %259 = vmatpush1.msra.mxu0 0.0
  %260 = vmatprep.subr.mxu0 0.0
  %261 = vmatpush1.msra.mxu0 0.0
  %262 = vmatprep.subr.mxu0 0.0
  %263 = vmatpush1.msra.mxu0 0.0
  %264 = vmatprep.subr.mxu0 0.0
  %265 = vmatpush1.msra.mxu0 0.0
  %266 = vmatprep.subr.mxu0 0.0
  %267 = vmatpush1.msra.mxu0 0.0
  %268 = vmatprep.subr.mxu0 0.0
  %269 = vmatpush1.msra.mxu0 0.0
  %270 = vmatprep.subr.mxu0 0.0
  %271 = vmatpush1.msra.mxu0 0.0
  %272 = vmatprep.subr.mxu0 0.0
  %273 = vmatpush1.msra.mxu0 0.0
  %274 = vmatprep.mubr.f32.mxu0 0.0
  %275 = vmatmul.mubr.f32.gmra.mrb[0].mxu0 %v208
  %v276 = vpop.f32.mrb[0].mxu0
  %v277 = vadd.f32 0.0, %v276
  %v278 = vpop.f32.mrb[0].mxu0
  %279 = vdwg.mxu0
  %v280 = vadd.f32 %v200, %v277
  %v281 = vlaneseq
  %v282 = vshrl.u32 %v281, 7
  %v283 = vsub.s32 0, %v282
  %v284 = vrot.slane %v38, %v283
  %v285 = vadd.f32 %v280, %v284
  %v286 = vld [vmem:[%s6] sm:$0xff]
  %v287 = vld [vmem:[%s6 + $0x8] sm:$0xff]
  %v288 = vld [vmem:[%s6 + $0x10] sm:$0xff]
  %v289 = vld [vmem:[%s6 + $0x18] sm:$0xff]
  %v290 = vld [vmem:[%s6 + $0x20] sm:$0xff]
  %v291 = vld [vmem:[%s6 + $0x28] sm:$0xff]
  %v292 = vld [vmem:[%s6 + $0x30] sm:$0xff]
  %v293 = vld [vmem:[%s6 + $0x38] sm:$0xff]
  %v294 = vld [vmem:[%s6 + $0x40] sm:$0xff]
  %v295 = vld [vmem:[%s6 + $0x48] sm:$0xff]
  %v296 = vld [vmem:[%s6 + $0x50] sm:$0xff]
  %v297 = vld [vmem:[%s6 + $0x58] sm:$0xff]
  %v298 = vld [vmem:[%s7] sm:$0x1f]
  %vm299 = vcmask 785408
  %v301 = vsel %vm299, %v285, 0
  %303 = vmatprep.subr.mxu0 0.0
  %304 = vmatpush1.msra.mxu0 %v286
  %305 = vmatprep.subr.mxu0 0.0
  %306 = vmatpush1.msra.mxu0 %v287
  %307 = vmatprep.subr.mxu0 0.0
  %308 = vmatpush1.msra.mxu0 %v288
  %309 = vmatprep.subr.mxu0 0.0
  %310 = vmatpush1.msra.mxu0 %v289
  %311 = vmatprep.subr.mxu0 0.0
  %312 = vmatpush1.msra.mxu0 %v290
  %313 = vmatprep.subr.mxu0 0.0
  %314 = vmatpush1.msra.mxu0 %v291
  %315 = vmatprep.subr.mxu0 0.0
  %316 = vmatpush1.msra.mxu0 %v292
  %317 = vmatprep.subr.mxu0 0.0
  %318 = vmatpush1.msra.mxu0 %v293
  %319 = vmatprep.subr.mxu0 0.0
  %320 = vmatpush1.msra.mxu0 %v294
  %321 = vmatprep.subr.mxu0 0.0
  %322 = vmatpush1.msra.mxu0 %v295
  %323 = vmatprep.subr.mxu0 0.0
  %324 = vmatpush1.msra.mxu0 %v296
  %325 = vmatprep.subr.mxu0 0.0
  %326 = vmatpush1.msra.mxu0 %v297
  %327 = vmatprep.subr.mxu0 0.0
  %328 = vmatpush1.msra.mxu0 0.0
  %329 = vmatprep.subr.mxu0 0.0
  %330 = vmatpush1.msra.mxu0 0.0
  %331 = vmatprep.subr.mxu0 0.0
  %332 = vmatpush1.msra.mxu0 0.0
  %333 = vmatprep.subr.mxu0 0.0
  %334 = vmatpush1.msra.mxu0 0.0
  %335 = vmatprep.subr.mxu0 0.0
  %336 = vmatpush1.msra.mxu0 0.0
  %337 = vmatprep.subr.mxu0 0.0
  %338 = vmatpush1.msra.mxu0 0.0
  %339 = vmatprep.subr.mxu0 0.0
  %340 = vmatpush1.msra.mxu0 0.0
  %341 = vmatprep.subr.mxu0 0.0
  %342 = vmatpush1.msra.mxu0 0.0
  %343 = vmatprep.subr.mxu0 0.0
  %344 = vmatpush1.msra.mxu0 0.0
  %345 = vmatprep.subr.mxu0 0.0
  %346 = vmatpush1.msra.mxu0 0.0
  %347 = vmatprep.subr.mxu0 0.0
  %348 = vmatpush1.msra.mxu0 0.0
  %349 = vmatprep.subr.mxu0 0.0
  %350 = vmatpush1.msra.mxu0 0.0
  %351 = vmatprep.subr.mxu0 0.0
  %352 = vmatpush1.msra.mxu0 0.0
  %353 = vmatprep.subr.mxu0 0.0
  %354 = vmatpush1.msra.mxu0 0.0
  %355 = vmatprep.subr.mxu0 0.0
  %356 = vmatpush1.msra.mxu0 0.0
  %357 = vmatprep.subr.mxu0 0.0
  %358 = vmatpush1.msra.mxu0 0.0
  %359 = vmatprep.subr.mxu0 0.0
  %360 = vmatpush1.msra.mxu0 0.0
  %361 = vmatprep.subr.mxu0 0.0
  %362 = vmatpush1.msra.mxu0 0.0
  %363 = vmatprep.subr.mxu0 0.0
  %364 = vmatpush1.msra.mxu0 0.0
  %365 = vmatprep.subr.mxu0 0.0
  %366 = vmatpush1.msra.mxu0 0.0
  %367 = vmatprep.mubr.f32.mxu0 0.0
  %368 = vmatmul.mubr.f32.gmra.mrb[0].mxu0 %v301
  %v369 = vpop.f32.mrb[0].mxu0
  %v370 = vadd.f32 0.0, %v369
  %v371 = vpop.f32.mrb[0].mxu0
  %372 = vdwg.mxu0
  %v373 = vmul.f32 %v285, %v285
  %v375 = vsel %vm299, %v373, 0
  %377 = vmatprep.subr.mxu0 0.0
  %378 = vmatpush1.msra.mxu0 %v286
  %379 = vmatprep.subr.mxu0 0.0
  %380 = vmatpush1.msra.mxu0 %v287
  %381 = vmatprep.subr.mxu0 0.0
  %382 = vmatpush1.msra.mxu0 %v288
  %383 = vmatprep.subr.mxu0 0.0
  %384 = vmatpush1.msra.mxu0 %v289
  %385 = vmatprep.subr.mxu0 0.0
  %386 = vmatpush1.msra.mxu0 %v290
  %387 = vmatprep.subr.mxu0 0.0
  %388 = vmatpush1.msra.mxu0 %v291
  %389 = vmatprep.subr.mxu0 0.0
  %390 = vmatpush1.msra.mxu0 %v292
  %391 = vmatprep.subr.mxu0 0.0
  %392 = vmatpush1.msra.mxu0 %v293
  %393 = vmatprep.subr.mxu0 0.0
  %394 = vmatpush1.msra.mxu0 %v294
  %395 = vmatprep.subr.mxu0 0.0
  %396 = vmatpush1.msra.mxu0 %v295
  %397 = vmatprep.subr.mxu0 0.0
  %398 = vmatpush1.msra.mxu0 %v296
  %399 = vmatprep.subr.mxu0 0.0
  %400 = vmatpush1.msra.mxu0 %v297
  %401 = vmatprep.subr.mxu0 0.0
  %402 = vmatpush1.msra.mxu0 0.0
  %403 = vmatprep.subr.mxu0 0.0
  %404 = vmatpush1.msra.mxu0 0.0
  %405 = vmatprep.subr.mxu0 0.0
  %406 = vmatpush1.msra.mxu0 0.0
  %407 = vmatprep.subr.mxu0 0.0
  %408 = vmatpush1.msra.mxu0 0.0
  %409 = vmatprep.subr.mxu0 0.0
  %410 = vmatpush1.msra.mxu0 0.0
  %411 = vmatprep.subr.mxu0 0.0
  %412 = vmatpush1.msra.mxu0 0.0
  %413 = vmatprep.subr.mxu0 0.0
  %414 = vmatpush1.msra.mxu0 0.0
  %415 = vmatprep.subr.mxu0 0.0
  %416 = vmatpush1.msra.mxu0 0.0
  %417 = vmatprep.subr.mxu0 0.0
  %418 = vmatpush1.msra.mxu0 0.0
  %419 = vmatprep.subr.mxu0 0.0
  %420 = vmatpush1.msra.mxu0 0.0
  %421 = vmatprep.subr.mxu0 0.0
  %422 = vmatpush1.msra.mxu0 0.0
  %423 = vmatprep.subr.mxu0 0.0
  %424 = vmatpush1.msra.mxu0 0.0
  %425 = vmatprep.subr.mxu0 0.0
  %426 = vmatpush1.msra.mxu0 0.0
  %427 = vmatprep.subr.mxu0 0.0
  %428 = vmatpush1.msra.mxu0 0.0
  %429 = vmatprep.subr.mxu0 0.0
  %430 = vmatpush1.msra.mxu0 0.0
  %431 = vmatprep.subr.mxu0 0.0
  %432 = vmatpush1.msra.mxu0 0.0
  %433 = vmatprep.subr.mxu0 0.0
  %434 = vmatpush1.msra.mxu0 0.0
  %435 = vmatprep.subr.mxu0 0.0
  %436 = vmatpush1.msra.mxu0 0.0
  %437 = vmatprep.subr.mxu0 0.0
  %438 = vmatpush1.msra.mxu0 0.0
  %439 = vmatprep.subr.mxu0 0.0
  %440 = vmatpush1.msra.mxu0 0.0
  %441 = vmatprep.mubr.f32.mxu0 0.0
  %442 = vmatmul.mubr.f32.gmra.mrb[0].mxu0 %v375
  %v443 = vpop.f32.mrb[0].mxu0
  %v444 = vadd.f32 0.0, %v443
  %v445 = vpop.f32.mrb[0].mxu0
  %446 = vdwg.mxu0
  %v447 = vmul.f32 %v370, %v370
  %v448 = vsub.f32 %v444, %v447
  %vm449 = vcmask 39936
  %v451 = vsel %vm449, %v370, 0
  %vm453 = vcmask 1044480
  %v455 = vsel %vm453, %v298, 0
  %457 = vmatprep.subr.mxu0 0.0
  %458 = vmatpush1.msra.mxu0 %v455
  %459 = vmatprep.subr.mxu0 0.0
  %460 = vmatpush1.msra.mxu0 0.0
  %461 = vmatprep.subr.mxu0 0.0
  %462 = vmatpush1.msra.mxu0 0.0
  %463 = vmatprep.subr.mxu0 0.0
  %464 = vmatpush1.msra.mxu0 0.0
  %465 = vmatprep.subr.mxu0 0.0
  %466 = vmatpush1.msra.mxu0 0.0
  %467 = vmatprep.subr.mxu0 0.0
  %468 = vmatpush1.msra.mxu0 0.0
  %469 = vmatprep.subr.mxu0 0.0
  %470 = vmatpush1.msra.mxu0 0.0
  %471 = vmatprep.subr.mxu0 0.0
  %472 = vmatpush1.msra.mxu0 0.0
  %473 = vmatprep.subr.mxu0 0.0
  %474 = vmatpush1.msra.mxu0 0.0
  %475 = vmatprep.subr.mxu0 0.0
  %476 = vmatpush1.msra.mxu0 0.0
  %477 = vmatprep.subr.mxu0 0.0
  %478 = vmatpush1.msra.mxu0 0.0
  %479 = vmatprep.subr.mxu0 0.0
  %480 = vmatpush1.msra.mxu0 0.0
  %481 = vmatprep.subr.mxu0 0.0
  %482 = vmatpush1.msra.mxu0 0.0
  %483 = vmatprep.subr.mxu0 0.0
  %484 = vmatpush1.msra.mxu0 0.0
  %485 = vmatprep.subr.mxu0 0.0
  %486 = vmatpush1.msra.mxu0 0.0
  %487 = vmatprep.subr.mxu0 0.0
  %488 = vmatpush1.msra.mxu0 0.0
  %489 = vmatprep.subr.mxu0 0.0
  %490 = vmatpush1.msra.mxu0 0.0
  %491 = vmatprep.subr.mxu0 0.0
  %492 = vmatpush1.msra.mxu0 0.0
  %493 = vmatprep.subr.mxu0 0.0
  %494 = vmatpush1.msra.mxu0 0.0
  %495 = vmatprep.subr.mxu0 0.0
  %496 = vmatpush1.msra.mxu0 0.0
  %497 = vmatprep.subr.mxu0 0.0
  %498 = vmatpush1.msra.mxu0 0.0
  %499 = vmatprep.subr.mxu0 0.0
  %500 = vmatpush1.msra.mxu0 0.0
  %501 = vmatprep.subr.mxu0 0.0
  %502 = vmatpush1.msra.mxu0 0.0
  %503 = vmatprep.subr.mxu0 0.0
  %504 = vmatpush1.msra.mxu0 0.0
  %505 = vmatprep.subr.mxu0 0.0
  %506 = vmatpush1.msra.mxu0 0.0
  %507 = vmatprep.subr.mxu0 0.0
  %508 = vmatpush1.msra.mxu0 0.0
  %509 = vmatprep.subr.mxu0 0.0
  %510 = vmatpush1.msra.mxu0 0.0
  %511 = vmatprep.subr.mxu0 0.0
  %512 = vmatpush1.msra.mxu0 0.0
  %513 = vmatprep.subr.mxu0 0.0
  %514 = vmatpush1.msra.mxu0 0.0
  %515 = vmatprep.subr.mxu0 0.0
  %516 = vmatpush1.msra.mxu0 0.0
  %517 = vmatprep.subr.mxu0 0.0
  %518 = vmatpush1.msra.mxu0 0.0
  %519 = vmatprep.subr.mxu0 0.0
  %520 = vmatpush1.msra.mxu0 0.0
  %521 = vmatprep.mubr.f32.mxu0 0.0
  %522 = vmatmul.mubr.f32.gmra.mrb[0].mxu0 %v451
  %v523 = vpop.f32.mrb[0].mxu0
  %v524 = vadd.f32 0.0, %v523
  %v525 = vpop.f32.mrb[0].mxu0
  %526 = vdwg.mxu0
  %v527 = vsub.f32 %v285, %v524
  %v529 = vsel %vm449, %v448, 0
  %531 = vmatprep.subr.mxu0 0.0
  %532 = vmatpush1.msra.mxu0 %v455
  %533 = vmatprep.subr.mxu0 0.0
  %534 = vmatpush1.msra.mxu0 0.0
  %535 = vmatprep.subr.mxu0 0.0
  %536 = vmatpush1.msra.mxu0 0.0
  %537 = vmatprep.subr.mxu0 0.0
  %538 = vmatpush1.msra.mxu0 0.0
  %539 = vmatprep.subr.mxu0 0.0
  %540 = vmatpush1.msra.mxu0 0.0
  %541 = vmatprep.subr.mxu0 0.0
  %542 = vmatpush1.msra.mxu0 0.0
  %543 = vmatprep.subr.mxu0 0.0
  %544 = vmatpush1.msra.mxu0 0.0
  %545 = vmatprep.subr.mxu0 0.0
  %546 = vmatpush1.msra.mxu0 0.0
  %547 = vmatprep.subr.mxu0 0.0
  %548 = vmatpush1.msra.mxu0 0.0
  %549 = vmatprep.subr.mxu0 0.0
  %550 = vmatpush1.msra.mxu0 0.0
  %551 = vmatprep.subr.mxu0 0.0
  %552 = vmatpush1.msra.mxu0 0.0
  %553 = vmatprep.subr.mxu0 0.0
  %554 = vmatpush1.msra.mxu0 0.0
  %555 = vmatprep.subr.mxu0 0.0
  %556 = vmatpush1.msra.mxu0 0.0
  %557 = vmatprep.subr.mxu0 0.0
  %558 = vmatpush1.msra.mxu0 0.0
  %559 = vmatprep.subr.mxu0 0.0
  %560 = vmatpush1.msra.mxu0 0.0
  %561 = vmatprep.subr.mxu0 0.0
  %562 = vmatpush1.msra.mxu0 0.0
  %563 = vmatprep.subr.mxu0 0.0
  %564 = vmatpush1.msra.mxu0 0.0
  %565 = vmatprep.subr.mxu0 0.0
  %566 = vmatpush1.msra.mxu0 0.0
  %567 = vmatprep.subr.mxu0 0.0
  %568 = vmatpush1.msra.mxu0 0.0
  %569 = vmatprep.subr.mxu0 0.0
  %570 = vmatpush1.msra.mxu0 0.0
  %571 = vmatprep.subr.mxu0 0.0
  %572 = vmatpush1.msra.mxu0 0.0
  %573 = vmatprep.subr.mxu0 0.0
  %574 = vmatpush1.msra.mxu0 0.0
  %575 = vmatprep.subr.mxu0 0.0
  %576 = vmatpush1.msra.mxu0 0.0
  %577 = vmatprep.subr.mxu0 0.0
  %578 = vmatpush1.msra.mxu0 0.0
  %579 = vmatprep.subr.mxu0 0.0
  %580 = vmatpush1.msra.mxu0 0.0
  %581 = vmatprep.subr.mxu0 0.0
  %582 = vmatpush1.msra.mxu0 0.0
  %583 = vmatprep.subr.mxu0 0.0
  %584 = vmatpush1.msra.mxu0 0.0
  %585 = vmatprep.subr.mxu0 0.0
  %586 = vmatpush1.msra.mxu0 0.0
  %587 = vmatprep.subr.mxu0 0.0
  %588 = vmatpush1.msra.mxu0 0.0
  %589 = vmatprep.subr.mxu0 0.0
  %590 = vmatpush1.msra.mxu0 0.0
  %591 = vmatprep.subr.mxu0 0.0
  %592 = vmatpush1.msra.mxu0 0.0
  %593 = vmatprep.subr.mxu0 0.0
  %594 = vmatpush1.msra.mxu0 0.0
  %595 = vmatprep.mubr.f32.mxu0 0.0
  %596 = vmatmul.mubr.f32.gmra.mrb[0].mxu0 %v529
  %v597 = vpop.f32.mrb[0].mxu0
  %v598 = vadd.f32 1e-05, %v597
  %v599 = vpop.f32.mrb[0].mxu0
  %600 = vdwg.mxu0
  %v601 = vrsqrt.pop %v598
  %v602 = vmul.f32 %v527, %v601
  %v603 = vlaneseq
  %v604 = vshrl.u32 %v603, 7
  %v605 = vsub.s32 0, %v604
  %v606 = vrot.slane %v39, %v605
  %v607 = vmul.f32 %v602, %v606
  %v608 = vlaneseq
  %v609 = vshrl.u32 %v608, 7
  %v610 = vsub.s32 0, %v609
  %v611 = vrot.slane %v41, %v610
  %v612 = vmul.f32 %v285, %v611
  %v613 = vadd.f32 %v607, %v612
  %v614 = vlaneseq
  %v615 = vshrl.u32 %v614, 7
  %v616 = vsub.s32 0, %v615
  %v617 = vrot.slane %v40, %v616
  %v618 = vadd.f32 %v613, %v617
  %v619 = vmax.f32 %v618, 0.0
  %v620 = vld [vmem:[%s9] sm:$0xff]
  %v621 = vld [vmem:[%s9 + $0x8] sm:$0xff]
  %v622 = vld [vmem:[%s9 + $0x10] sm:$0xff]
  %v623 = vld [vmem:[%s9 + $0x18] sm:$0xff]
  %v624 = vld [vmem:[%s9 + $0x20] sm:$0xff]
  %v625 = vld [vmem:[%s9 + $0x28] sm:$0xff]
  %v626 = vld [vmem:[%s9 + $0x30] sm:$0xff]
  %v627 = vld [vmem:[%s9 + $0x38] sm:$0xff]
  %v628 = vld [vmem:[%s9 + $0x40] sm:$0xff]
  %v629 = vld [vmem:[%s9 + $0x48] sm:$0xff]
  %v630 = vld [vmem:[%s9 + $0x50] sm:$0xff]
  %v631 = vld [vmem:[%s9 + $0x58] sm:$0xff]
  %v632 = vld [vmem:[%s10] sm:$0x1]
  %v633 = vlaneseq
  %v634 = vshrl.u32 %v633, 7
  %v635 = vsub.s32 0, %v634
  %v636 = vrot.slane %v632, %v635
  %v638 = vsel %vm299, %v619, 0
  %640 = vmatprep.subr.mxu0 0.0
  %641 = vmatpush1.msra.mxu0 %v620
  %642 = vmatprep.subr.mxu0 0.0
  %643 = vmatpush1.msra.mxu0 %v621
  %644 = vmatprep.subr.mxu0 0.0
  %645 = vmatpush1.msra.mxu0 %v622
  %646 = vmatprep.subr.mxu0 0.0
  %647 = vmatpush1.msra.mxu0 %v623
  %648 = vmatprep.subr.mxu0 0.0
  %649 = vmatpush1.msra.mxu0 %v624
  %650 = vmatprep.subr.mxu0 0.0
  %651 = vmatpush1.msra.mxu0 %v625
  %652 = vmatprep.subr.mxu0 0.0
  %653 = vmatpush1.msra.mxu0 %v626
  %654 = vmatprep.subr.mxu0 0.0
  %655 = vmatpush1.msra.mxu0 %v627
  %656 = vmatprep.subr.mxu0 0.0
  %657 = vmatpush1.msra.mxu0 %v628
  %658 = vmatprep.subr.mxu0 0.0
  %659 = vmatpush1.msra.mxu0 %v629
  %660 = vmatprep.subr.mxu0 0.0
  %661 = vmatpush1.msra.mxu0 %v630
  %662 = vmatprep.subr.mxu0 0.0
  %663 = vmatpush1.msra.mxu0 %v631
  %664 = vmatprep.subr.mxu0 0.0
  %665 = vmatpush1.msra.mxu0 0.0
  %666 = vmatprep.subr.mxu0 0.0
  %667 = vmatpush1.msra.mxu0 0.0
  %668 = vmatprep.subr.mxu0 0.0
  %669 = vmatpush1.msra.mxu0 0.0
  %670 = vmatprep.subr.mxu0 0.0
  %671 = vmatpush1.msra.mxu0 0.0
  %672 = vmatprep.subr.mxu0 0.0
  %673 = vmatpush1.msra.mxu0 0.0
  %674 = vmatprep.subr.mxu0 0.0
  %675 = vmatpush1.msra.mxu0 0.0
  %676 = vmatprep.subr.mxu0 0.0
  %677 = vmatpush1.msra.mxu0 0.0
  %678 = vmatprep.subr.mxu0 0.0
  %679 = vmatpush1.msra.mxu0 0.0
  %680 = vmatprep.subr.mxu0 0.0
  %681 = vmatpush1.msra.mxu0 0.0
  %682 = vmatprep.subr.mxu0 0.0
  %683 = vmatpush1.msra.mxu0 0.0
  %684 = vmatprep.subr.mxu0 0.0
  %685 = vmatpush1.msra.mxu0 0.0
  %686 = vmatprep.subr.mxu0 0.0
  %687 = vmatpush1.msra.mxu0 0.0
  %688 = vmatprep.subr.mxu0 0.0
  %689 = vmatpush1.msra.mxu0 0.0
  %690 = vmatprep.subr.mxu0 0.0
  %691 = vmatpush1.msra.mxu0 0.0
  %692 = vmatprep.subr.mxu0 0.0
  %693 = vmatpush1.msra.mxu0 0.0
  %694 = vmatprep.subr.mxu0 0.0
  %695 = vmatpush1.msra.mxu0 0.0
  %696 = vmatprep.subr.mxu0 0.0
  %697 = vmatpush1.msra.mxu0 0.0
  %698 = vmatprep.subr.mxu0 0.0
  %699 = vmatpush1.msra.mxu0 0.0
  %700 = vmatprep.subr.mxu0 0.0
  %701 = vmatpush1.msra.mxu0 0.0
  %702 = vmatprep.subr.mxu0 0.0
  %703 = vmatpush1.msra.mxu0 0.0
  %704 = vmatprep.mubr.f32.mxu0 0.0
  %705 = vmatmul.mubr.f32.gmra.mrb[0].mxu0 %v638
  %v706 = vpop.f32.mrb[0].mxu0
  %v707 = vadd.f32 %v636, %v706
  %v708 = vpop.f32.mrb[0].mxu0
  %709 = vdwg.mxu0
  %v710 = vmax.f32 %v707, 0.0
  %v711 = vld [vmem:[%s10 + $0x1] sm:$0x1]
  %v712 = vlaneseq
  %v713 = vshrl.u32 %v712, 7
  %v714 = vsub.s32 0, %v713
  %v715 = vrot.slane %v711, %v714
  %v716 = vmul.f32 %v710, %v715
  %vm717 = vcmask 261120
  %v718 = vsel %vm717, %v716, 0.0
  %719 = vadd.xlane.f32.xlu0 %v718
  %v720 = vpop.xlane.xlu0 %719
  %v721 = vld [vmem:[%s10 + $0x2] sm:$0x1]
  %v722 = vlaneseq
  %v723 = vshrl.u32 %v722, 7
  %v724 = vsub.s32 0, %v723
  %v725 = vrot.slane %v721, %v724
  %v726 = vadd.f32 %v720, %v725
  %vm727 = vcmask 7168
  %728 = vst.msk [vmem:[%s11] sm:$0xff] %vm727, %v726
  // Predicated region
  $region46: #{tpu_custom_call.1} parent=0 // pred_check
    _
  $region47: #{tpu_custom_call.1} parent=0 // pred_check_branch
    %730 = sbr.rel (0) target = $region49
  $region48: #{tpu_custom_call.1} parent=0 // pred_region
    _
  $region49: #{tpu_custom_call.1} parent=0 // pred_fallthru
    _
  // Predicated region
  $region50: #{tpu_custom_call.1} parent=0 // pred_check
    _
  $region51: #{tpu_custom_call.1} parent=0 // pred_check_branch
    %732 = sbr.rel (0) target = $region53
  $region52: #{tpu_custom_call.1} parent=0 // pred_region
    _
  $region53: #{tpu_custom_call.1} parent=0 // pred_fallthru
    _

</llo_original>
